<compile_context>
chip_gen: v7x
topology: tpu7x:2x2x1
jax: 0.10.0
libtpu: 0.0.40
codegen_flags: <defaults>
</compile_context>

<pallas_src>
import functools
import math

import jax
import jax.numpy as jnp
from jax.experimental import pallas as pl
from jax.experimental.pallas import tpu as pltpu

VMEM = pltpu.MemorySpace.VMEM
SMEM = pltpu.MemorySpace.SMEM
LANE = 128


# ---------------------------------------------------------------------------
# Padding helpers (layout plumbing)
# ---------------------------------------------------------------------------
def _round_up(x, m):
    return (x + m - 1) // m * m


def _pad_last(x, target):
    pad = target - x.shape[-1]
    if pad == 0:
        return x
    return jnp.pad(x, [(0, 0)] * (x.ndim - 1) + [(0, pad)])


def _pad_2d(w, rows, cols):
    return jnp.pad(w, ((0, rows - w.shape[0]), (0, cols - w.shape[1])))


# ---------------------------------------------------------------------------
# Fused forward kernel: encoder matmul -> LN+Linear projectors -> CLIP head
# ---------------------------------------------------------------------------
def _fused_forward_kernel(audio0_ref, text_ref, w_enc_ref, ln_ref,
                          a_w_ref, t_w_ref, temp_ref, out_ref,
                          *, audio_dim, text_dim, a_p, t_p):
    f32 = jnp.float32
    bf16 = jnp.bfloat16

    # ---- stand-in audio encoder: Linear applied only to the s==0 slice ----
    # audio0 is already bf16 (cast in wrapper); padded w_enc columns are zero,
    # so padded lanes of h_audio are exactly zero.
    h_audio = jnp.dot(audio0_ref[...], w_enc_ref[...],
                      preferred_element_type=f32)                        # (B, a_p) f32

    # ---- two-pass LayerNorm (eps=1e-5, biased var) + Linear(bias=False) ----
    def ln_proj(x, g, b, w, true_d):
        lane = jax.lax.broadcasted_iota(jnp.int32, x.shape, 1)
        valid = lane < true_d
        inv_d = 1.0 / float(true_d)
        mu = jnp.sum(x, axis=-1, keepdims=True) * inv_d        # padded lanes are exact zeros
        centered = jnp.where(valid, x - mu, 0.0)
        var = jnp.sum(centered * centered, axis=-1, keepdims=True) * inv_d
        xn = centered * jax.lax.rsqrt(var + 1e-5) * g + b      # padded g/b are zero
        return jnp.dot(xn.astype(bf16), w, preferred_element_type=f32)

    z_a = ln_proj(h_audio, ln_ref[0:1, :a_p], ln_ref[1:2, :a_p],
                  a_w_ref[...], audio_dim)
    z_t = ln_proj(text_ref[...], ln_ref[2:3, :t_p], ln_ref[3:4, :t_p],
                  t_w_ref[...], text_dim)

    # ---- CLIP head: L2-normalize (EUP rsqrt), logits, symmetric CE, accuracies ----
    inv_na = jax.lax.rsqrt(jnp.maximum(jnp.sum(z_a * z_a, -1, keepdims=True), 1e-24))
    inv_nt = jax.lax.rsqrt(jnp.maximum(jnp.sum(z_t * z_t, -1, keepdims=True), 1e-24))
    za = z_a * inv_na
    zt = z_t * inv_nt

    temp = temp_ref[0, 0]   # min(exp(logit_scale), 100) precomputed in the wrapper (SMEM)
    # za @ zt.T: contract last dims on the MXU.  Fine while N is ~1 vreg;
    # at scale produce z_text transposed instead (see TODO above).
    logits = jax.lax.dot_general(
        za.astype(bf16), zt.astype(bf16),
        dimension_numbers=(((1,), (1,)), ((), ())),
        preferred_element_type=f32) * temp                               # (N, N) f32
    n = logits.shape[0]

    row_i = jax.lax.broadcasted_iota(jnp.int32, (n, n), 0)
    col_i = jax.lax.broadcasted_iota(jnp.int32, (n, n), 1)
    # diagonal computed once (row-CE and col-CE share the same targets)
    diag = jnp.sum(jnp.where(row_i == col_i, logits, 0.0), axis=-1, keepdims=True)  # (N,1)

    row_max = jnp.max(logits, axis=-1, keepdims=True)
    row_lse = jnp.log(jnp.sum(jnp.exp(logits - row_max), -1, keepdims=True)) + row_max
    col_max = jnp.max(logits, axis=0, keepdims=True)
    col_lse = jnp.log(jnp.sum(jnp.exp(logits - col_max), 0, keepdims=True)) + col_max

    loss = 0.5 * (jnp.mean(row_lse) + jnp.mean(col_lse)) - jnp.mean(diag)

    # accuracies: first-occurrence argmax (matches torch .max(dim)[1])
    pred_a = jnp.min(jnp.where(logits >= row_max, col_i, n), axis=-1, keepdims=True)  # (N,1)
    targ_r = jax.lax.broadcasted_iota(jnp.int32, (n, 1), 0)
    acc_audio = jnp.mean((pred_a == targ_r).astype(f32))

    pred_t = jnp.min(jnp.where(logits >= col_max, row_i, n), axis=0, keepdims=True)   # (1,N)
    targ_c = jax.lax.broadcasted_iota(jnp.int32, (1, n), 1)
    acc_text = jnp.mean((pred_t == targ_c).astype(f32))

    # single lane-dense output row: [loss, acc_audio, acc_text, 0, ...]
    lane_o = jax.lax.broadcasted_iota(jnp.int32, out_ref.shape, 1)
    out_ref[...] = (jnp.where(lane_o == 0, loss, 0.0)
                    + jnp.where(lane_o == 1, acc_audio, 0.0)
                    + jnp.where(lane_o == 2, acc_text, 0.0))


# ---------------------------------------------------------------------------
# Parameters (raw, torch-layout) + one-time prepare step (pad + bf16 cast)
# ---------------------------------------------------------------------------
def init_params(key, in_dim, audio_dim, text_dim, mlp_dim, temperature):
    k1, k2, k3 = jax.random.split(key, 3)
    return {
        "w_enc": 0.02 * jax.random.normal(k1, (in_dim, audio_dim), jnp.float32),
        "a_gamma": jnp.ones((audio_dim,), jnp.float32),
        "a_beta": jnp.zeros((audio_dim,), jnp.float32),
        "a_w": 0.02 * jax.random.normal(k2, (audio_dim, mlp_dim), jnp.float32),
        "t_gamma": jnp.ones((text_dim,), jnp.float32),
        "t_beta": jnp.zeros((text_dim,), jnp.float32),
        "t_w": 0.02 * jax.random.normal(k3, (text_dim, mlp_dim), jnp.float32),
        "logit_scale": jnp.array([math.log(1.0 / temperature)], jnp.float32),
    }


def prepare_params(params):
    """One-time: pad weights to 128 lanes, cast matmul weights to bf16, merge LN params."""
    in_dim, audio_dim = params["w_enc"].shape
    text_dim, mlp_dim = params["t_w"].shape
    in_p = _round_up(in_dim, LANE)
    a_p = _round_up(audio_dim, LANE)
    t_p = _round_up(text_dim, LANE)
    m_p = _round_up(mlp_dim, LANE)
    p = max(a_p, t_p)

    ln = jnp.zeros((4, p), jnp.float32)
    ln = ln.at[0, :audio_dim].set(params["a_gamma"])
    ln = ln.at[1, :audio_dim].set(params["a_beta"])
    ln = ln.at[2, :text_dim].set(params["t_gamma"])
    ln = ln.at[3, :text_dim].set(params["t_beta"])

    return {
        "w_enc": _pad_2d(params["w_enc"], in_p, a_p).astype(jnp.bfloat16),
        "a_w": _pad_2d(params["a_w"], a_p, m_p).astype(jnp.bfloat16),
        "t_w": _pad_2d(params["t_w"], t_p, m_p).astype(jnp.bfloat16),
        "ln": ln,
        "logit_scale": params["logit_scale"],
    }


# ---------------------------------------------------------------------------
# Per-step wrapper (only activations are padded / cast per call)
# ---------------------------------------------------------------------------
def contrastive_forward(prepared, audio, text_emb, *, audio_dim, text_dim):
    in_p, a_p = prepared["w_enc"].shape
    t_p = prepared["t_w"].shape[0]

    # s==0 slice BEFORE the encoder matmul (S-fold less MXU/DMA work);
    # cast to bf16 here (it only feeds the bf16 encoder matmul).
    audio0 = _pad_last(audio[:, 0, :], in_p).astype(jnp.bfloat16)   # (B, in_p) bf16
    text_p = _pad_last(text_emb, t_p)                               # (B, t_p)  f32 (goes through LN)

    # scalar temperature = clamp(exp(logit_scale), max=100), computed outside the kernel
    temp = jnp.minimum(jnp.exp(prepared["logit_scale"][0]), 100.0)
    temp = temp.reshape(1, 1).astype(jnp.float32)

    kernel = functools.partial(
        _fused_forward_kernel,
        audio_dim=int(audio_dim), text_dim=int(text_dim),
        a_p=int(a_p), t_p=int(t_p),
    )
    out = pl.pallas_call(
        kernel,
        out_shape=jax.ShapeDtypeStruct((1, LANE), jnp.float32),
        in_specs=[pl.BlockSpec(memory_space=VMEM)] * 6
                 + [pl.BlockSpec(memory_space=SMEM)],
        out_specs=pl.BlockSpec(memory_space=VMEM),
    )(audio0, text_p, prepared["w_enc"], prepared["ln"],
      prepared["a_w"], prepared["t_w"], temp)

    return out[0, 0], out[0, 1], out[0, 2], prepared["logit_scale"]


# ---------------------------------------------------------------------------
# Pure-JAX reference (same math / same bf16 cast points, for sanity check)
# ---------------------------------------------------------------------------
def reference_forward(params, audio, text_emb):
    bf16, f32 = jnp.bfloat16, jnp.float32
    h_a = jnp.dot(audio[:, 0, :].astype(bf16), params["w_enc"].astype(bf16),
                  preferred_element_type=f32)

    def ln(x, g, b):
        mu = x.mean(-1, keepdims=True)
        var = jnp.mean((x - mu) ** 2, -1, keepdims=True)
        return (x - mu) * jax.lax.rsqrt(var + 1e-5) * g + b

    z_a = jnp.dot(ln(h_a, params["a_gamma"], params["a_beta"]).astype(bf16),
                  params["a_w"].astype(bf16), preferred_element_type=f32)
    z_t = jnp.dot(ln(text_emb, params["t_gamma"], params["t_beta"]).astype(bf16),
                  params["t_w"].astype(bf16), preferred_element_type=f32)

    # F.normalize(dim=1): x / max(||x||, 1e-12)
    za = z_a * jax.lax.rsqrt(jnp.maximum(jnp.sum(z_a * z_a, -1, keepdims=True), 1e-24))
    zt = z_t * jax.lax.rsqrt(jnp.maximum(jnp.sum(z_t * z_t, -1, keepdims=True), 1e-24))

    temp = jnp.minimum(jnp.exp(params["logit_scale"][0]), 100.0)
    logits = jnp.dot(za.astype(bf16), zt.astype(bf16).T, preferred_element_type=f32) * temp
    N = logits.shape[0]
    labels = jnp.arange(N)

    def ce(lg):
        lse = jax.scipy.special.logsumexp(lg, axis=-1)
        return jnp.mean(lse - lg[labels, labels])

    loss = 0.5 * (ce(logits) + ce(logits.T))
    acc_a = jnp.mean((jnp.argmax(logits, -1) == labels).astype(f32))
    acc_t = jnp.mean((jnp.argmax(logits.T, -1) == labels).astype(f32))
    return loss, acc_a, acc_t


if __name__ == "__main__":
    B, S, IN_DIM = 8, 4, 24          # batch, audio seq length, raw audio feature dim
    AUDIO_DIM, TEXT_DIM, MLP_DIM = 32, 16, 32
    TEMPERATURE = 0.07

    key = jax.random.PRNGKey(0)
    kp, ka, kt = jax.random.split(key, 3)
    params = init_params(kp, IN_DIM, AUDIO_DIM, TEXT_DIM, MLP_DIM, TEMPERATURE)
    prepared = jax.block_until_ready(prepare_params(params))   # one-time pad + bf16 cast

    audio = jax.random.normal(ka, (B, S, IN_DIM), jnp.float32)
    text_emb = jax.random.normal(kt, (B, TEXT_DIM), jnp.float32)   # glove text embeddings

    fwd = jax.jit(functools.partial(contrastive_forward,
                                    audio_dim=AUDIO_DIM, text_dim=TEXT_DIM))
    loss, acc_a, acc_t, logit_scale = jax.block_until_ready(fwd(prepared, audio, text_emb))

    ref_loss, ref_acc_a, ref_acc_t = reference_forward(params, audio, text_emb)
    assert jnp.allclose(loss, ref_loss, rtol=5e-3, atol=2e-2), (loss, ref_loss)
    assert jnp.allclose(acc_a, ref_acc_a, atol=1e-6), (acc_a, ref_acc_a)
    assert jnp.allclose(acc_t, ref_acc_t, atol=1e-6), (acc_t, ref_acc_t)

    print("KERNEL_OK")
</pallas_src>

<mosaic_0001>
module attributes {stable_mosaic.version = 11 : i64} {
  func.func @_fused_forward_kernel(%arg0: memref<8x128xbf16, #tpu.memory_space<vmem>>, %arg1: memref<8x128xf32, #tpu.memory_space<vmem>>, %arg2: memref<128x128xbf16, #tpu.memory_space<vmem>>, %arg3: memref<4x128xf32, #tpu.memory_space<vmem>>, %arg4: memref<128x128xbf16, #tpu.memory_space<vmem>>, %arg5: memref<128x128xbf16, #tpu.memory_space<vmem>>, %arg6: memref<1x1xf32, #tpu.memory_space<smem>>, %arg7: memref<1x128xf32, #tpu.memory_space<vmem>>) attributes {dimension_semantics = [], scalar_prefetch = 0 : i64, scratch_operands = 0 : i64, tpu.core_type = #tpu.core_type<tc>} {
    %c0 = arith.constant 0 : index
    %c0_0 = arith.constant 0 : index
    %0 = vector.load %arg0[%c0, %c0_0] : memref<8x128xbf16, #tpu.memory_space<vmem>>, vector<8x128xbf16>
    %c0_1 = arith.constant 0 : index
    %c0_2 = arith.constant 0 : index
    %1 = vector.load %arg2[%c0_1, %c0_2] : memref<128x128xbf16, #tpu.memory_space<vmem>>, vector<128x128xbf16>
    %cst = arith.constant dense<0.000000e+00> : vector<8x128xf32>
    %2 = tpu.matmul %0, %1, %cst {dimension_numbers = #tpu.dot_dimension_numbers<[1], [0], [0], [1], [0, 0, 1, 1], [], []>} : vector<8x128xbf16>, vector<128x128xbf16>, vector<8x128xf32> -> vector<8x128xf32>
    %c0_3 = arith.constant 0 : index
    %c0_4 = arith.constant 0 : index
    %3 = vector.load %arg3[%c0_3, %c0_4] : memref<4x128xf32, #tpu.memory_space<vmem>>, vector<1x128xf32>
    %c1 = arith.constant 1 : index
    %c0_5 = arith.constant 0 : index
    %4 = vector.load %arg3[%c1, %c0_5] : memref<4x128xf32, #tpu.memory_space<vmem>>, vector<1x128xf32>
    %c0_6 = arith.constant 0 : index
    %c0_7 = arith.constant 0 : index
    %5 = vector.load %arg4[%c0_6, %c0_7] : memref<128x128xbf16, #tpu.memory_space<vmem>>, vector<128x128xbf16>
    %6 = tpu.iota {dimensions = array<i32: 1>} : vector<8x128xi32>
    %c32_i32 = arith.constant 32 : i32
    %7 = vector.broadcast %c32_i32 : i32 to vector<8x128xi32>
    %8 = arith.cmpi slt, %6, %7 : vector<8x128xi32>
    %cst_8 = arith.constant dense<0.000000e+00> : vector<8xf32>
    %9 = vector.multi_reduction <add>, %2, %cst_8 [1] : vector<8x128xf32> to vector<8xf32>
    %10 = vector.shape_cast %9 : vector<8xf32> to vector<8x1xf32>
    %cst_9 = arith.constant 3.125000e-02 : f32
    %11 = vector.broadcast %cst_9 : f32 to vector<8x1xf32>
    %12 = arith.mulf %10, %11 : vector<8x1xf32>
    %13 = vector.broadcast %12 : vector<8x1xf32> to vector<8x128xf32>
    %14 = arith.subf %2, %13 : vector<8x128xf32>
    %cst_10 = arith.constant 0.000000e+00 : f32
    %15 = vector.broadcast %cst_10 : f32 to vector<8x128xf32>
    %16 = arith.select %8, %14, %15 : vector<8x128xi1>, vector<8x128xf32>
    %17 = arith.mulf %16, %16 : vector<8x128xf32>
    %cst_11 = arith.constant dense<0.000000e+00> : vector<8xf32>
    %18 = vector.multi_reduction <add>, %17, %cst_11 [1] : vector<8x128xf32> to vector<8xf32>
    %19 = vector.shape_cast %18 : vector<8xf32> to vector<8x1xf32>
    %cst_12 = arith.constant 3.125000e-02 : f32
    %20 = vector.broadcast %cst_12 : f32 to vector<8x1xf32>
    %21 = arith.mulf %19, %20 : vector<8x1xf32>
    %cst_13 = arith.constant 9.99999974E-6 : f32
    %22 = vector.broadcast %cst_13 : f32 to vector<8x1xf32>
    %23 = arith.addf %21, %22 : vector<8x1xf32>
    %24 = math.rsqrt %23 : vector<8x1xf32>
    %25 = vector.broadcast %24 : vector<8x1xf32> to vector<8x128xf32>
    %26 = arith.mulf %16, %25 : vector<8x128xf32>
    %27 = vector.broadcast %3 : vector<1x128xf32> to vector<8x128xf32>
    %28 = arith.mulf %26, %27 : vector<8x128xf32>
    %29 = vector.broadcast %4 : vector<1x128xf32> to vector<8x128xf32>
    %30 = arith.addf %28, %29 : vector<8x128xf32>
    %31 = arith.truncf %30 : vector<8x128xf32> to vector<8x128xbf16>
    %cst_14 = arith.constant dense<0.000000e+00> : vector<8x128xf32>
    %32 = tpu.matmul %31, %5, %cst_14 {dimension_numbers = #tpu.dot_dimension_numbers<[1], [0], [0], [1], [0, 0, 1, 1], [], []>} : vector<8x128xbf16>, vector<128x128xbf16>, vector<8x128xf32> -> vector<8x128xf32>
    %c0_15 = arith.constant 0 : index
    %c0_16 = arith.constant 0 : index
    %33 = vector.load %arg1[%c0_15, %c0_16] : memref<8x128xf32, #tpu.memory_space<vmem>>, vector<8x128xf32>
    %c2 = arith.constant 2 : index
    %c0_17 = arith.constant 0 : index
    %34 = vector.load %arg3[%c2, %c0_17] : memref<4x128xf32, #tpu.memory_space<vmem>>, vector<1x128xf32>
    %c3 = arith.constant 3 : index
    %c0_18 = arith.constant 0 : index
    %35 = vector.load %arg3[%c3, %c0_18] : memref<4x128xf32, #tpu.memory_space<vmem>>, vector<1x128xf32>
    %c0_19 = arith.constant 0 : index
    %c0_20 = arith.constant 0 : index
    %36 = vector.load %arg5[%c0_19, %c0_20] : memref<128x128xbf16, #tpu.memory_space<vmem>>, vector<128x128xbf16>
    %37 = tpu.iota {dimensions = array<i32: 1>} : vector<8x128xi32>
    %c16_i32 = arith.constant 16 : i32
    %38 = vector.broadcast %c16_i32 : i32 to vector<8x128xi32>
    %39 = arith.cmpi slt, %37, %38 : vector<8x128xi32>
    %cst_21 = arith.constant dense<0.000000e+00> : vector<8xf32>
    %40 = vector.multi_reduction <add>, %33, %cst_21 [1] : vector<8x128xf32> to vector<8xf32>
    %41 = vector.shape_cast %40 : vector<8xf32> to vector<8x1xf32>
    %cst_22 = arith.constant 6.250000e-02 : f32
    %42 = vector.broadcast %cst_22 : f32 to vector<8x1xf32>
    %43 = arith.mulf %41, %42 : vector<8x1xf32>
    %44 = vector.broadcast %43 : vector<8x1xf32> to vector<8x128xf32>
    %45 = arith.subf %33, %44 : vector<8x128xf32>
    %cst_23 = arith.constant 0.000000e+00 : f32
    %46 = vector.broadcast %cst_23 : f32 to vector<8x128xf32>
    %47 = arith.select %39, %45, %46 : vector<8x128xi1>, vector<8x128xf32>
    %48 = arith.mulf %47, %47 : vector<8x128xf32>
    %cst_24 = arith.constant dense<0.000000e+00> : vector<8xf32>
    %49 = vector.multi_reduction <add>, %48, %cst_24 [1] : vector<8x128xf32> to vector<8xf32>
    %50 = vector.shape_cast %49 : vector<8xf32> to vector<8x1xf32>
    %cst_25 = arith.constant 6.250000e-02 : f32
    %51 = vector.broadcast %cst_25 : f32 to vector<8x1xf32>
    %52 = arith.mulf %50, %51 : vector<8x1xf32>
    %cst_26 = arith.constant 9.99999974E-6 : f32
    %53 = vector.broadcast %cst_26 : f32 to vector<8x1xf32>
    %54 = arith.addf %52, %53 : vector<8x1xf32>
    %55 = math.rsqrt %54 : vector<8x1xf32>
    %56 = vector.broadcast %55 : vector<8x1xf32> to vector<8x128xf32>
    %57 = arith.mulf %47, %56 : vector<8x128xf32>
    %58 = vector.broadcast %34 : vector<1x128xf32> to vector<8x128xf32>
    %59 = arith.mulf %57, %58 : vector<8x128xf32>
    %60 = vector.broadcast %35 : vector<1x128xf32> to vector<8x128xf32>
    %61 = arith.addf %59, %60 : vector<8x128xf32>
    %62 = arith.truncf %61 : vector<8x128xf32> to vector<8x128xbf16>
    %cst_27 = arith.constant dense<0.000000e+00> : vector<8x128xf32>
    %63 = tpu.matmul %62, %36, %cst_27 {dimension_numbers = #tpu.dot_dimension_numbers<[1], [0], [0], [1], [0, 0, 1, 1], [], []>} : vector<8x128xbf16>, vector<128x128xbf16>, vector<8x128xf32> -> vector<8x128xf32>
    %64 = arith.mulf %32, %32 : vector<8x128xf32>
    %cst_28 = arith.constant dense<0.000000e+00> : vector<8xf32>
    %65 = vector.multi_reduction <add>, %64, %cst_28 [1] : vector<8x128xf32> to vector<8xf32>
    %66 = vector.shape_cast %65 : vector<8xf32> to vector<8x1xf32>
    %cst_29 = arith.constant 1.000000e-24 : f32
    %67 = vector.broadcast %cst_29 : f32 to vector<8x1xf32>
    %68 = arith.maximumf %66, %67 : vector<8x1xf32>
    %69 = math.rsqrt %68 : vector<8x1xf32>
    %70 = arith.mulf %63, %63 : vector<8x128xf32>
    %cst_30 = arith.constant dense<0.000000e+00> : vector<8xf32>
    %71 = vector.multi_reduction <add>, %70, %cst_30 [1] : vector<8x128xf32> to vector<8xf32>
    %72 = vector.shape_cast %71 : vector<8xf32> to vector<8x1xf32>
    %cst_31 = arith.constant 1.000000e-24 : f32
    %73 = vector.broadcast %cst_31 : f32 to vector<8x1xf32>
    %74 = arith.maximumf %72, %73 : vector<8x1xf32>
    %75 = math.rsqrt %74 : vector<8x1xf32>
    %76 = vector.broadcast %69 : vector<8x1xf32> to vector<8x128xf32>
    %77 = arith.mulf %32, %76 : vector<8x128xf32>
    %78 = vector.broadcast %75 : vector<8x1xf32> to vector<8x128xf32>
    %79 = arith.mulf %63, %78 : vector<8x128xf32>
    %c0_32 = arith.constant 0 : index
    %c0_33 = arith.constant 0 : index
    %80 = memref.load %arg6[%c0_32, %c0_33] : memref<1x1xf32, #tpu.memory_space<smem>>
    %81 = arith.truncf %77 : vector<8x128xf32> to vector<8x128xbf16>
    %82 = arith.truncf %79 : vector<8x128xf32> to vector<8x128xbf16>
    %cst_34 = arith.constant dense<0.000000e+00> : vector<8x8xf32>
    %83 = tpu.matmul %81, %82, %cst_34 {dimension_numbers = #tpu.dot_dimension_numbers<[1], [1], [0], [0], [0, 0, 1, 0], [], []>} : vector<8x128xbf16>, vector<8x128xbf16>, vector<8x8xf32> -> vector<8x8xf32>
    %84 = vector.broadcast %80 : f32 to vector<8x8xf32>
    %85 = arith.mulf %83, %84 : vector<8x8xf32>
    %86 = tpu.iota {dimensions = array<i32: 0>} : vector<8x8xi32>
    %87 = tpu.iota {dimensions = array<i32: 1>} : vector<8x8xi32>
    %88 = arith.cmpi eq, %86, %87 : vector<8x8xi32>
    %cst_35 = arith.constant 0.000000e+00 : f32
    %89 = vector.broadcast %cst_35 : f32 to vector<8x8xf32>
    %90 = arith.select %88, %85, %89 : vector<8x8xi1>, vector<8x8xf32>
    %cst_36 = arith.constant dense<0.000000e+00> : vector<8xf32>
    %91 = vector.multi_reduction <add>, %90, %cst_36 [1] : vector<8x8xf32> to vector<8xf32>
    %92 = vector.shape_cast %91 : vector<8xf32> to vector<8x1xf32>
    %cst_37 = arith.constant dense<0xFF800000> : vector<8xf32>
    %93 = vector.multi_reduction <maximumf>, %85, %cst_37 [1] : vector<8x8xf32> to vector<8xf32>
    %94 = vector.shape_cast %93 : vector<8xf32> to vector<8x1xf32>
    %95 = vector.broadcast %94 : vector<8x1xf32> to vector<8x8xf32>
    %96 = arith.subf %85, %95 : vector<8x8xf32>
    %97 = math.exp %96 : vector<8x8xf32>
    %cst_38 = arith.constant dense<0.000000e+00> : vector<8xf32>
    %98 = vector.multi_reduction <add>, %97, %cst_38 [1] : vector<8x8xf32> to vector<8xf32>
    %99 = vector.shape_cast %98 : vector<8xf32> to vector<8x1xf32>
    %100 = math.log %99 : vector<8x1xf32>
    %101 = arith.addf %100, %94 : vector<8x1xf32>
    %cst_39 = arith.constant dense<0xFF800000> : vector<8xf32>
    %102 = vector.multi_reduction <maximumf>, %85, %cst_39 [0] : vector<8x8xf32> to vector<8xf32>
    %103 = vector.shape_cast %102 : vector<8xf32> to vector<1x8xf32>
    %104 = vector.broadcast %103 : vector<1x8xf32> to vector<8x8xf32>
    %105 = arith.subf %85, %104 : vector<8x8xf32>
    %106 = math.exp %105 : vector<8x8xf32>
    %cst_40 = arith.constant dense<0.000000e+00> : vector<8xf32>
    %107 = vector.multi_reduction <add>, %106, %cst_40 [0] : vector<8x8xf32> to vector<8xf32>
    %108 = vector.shape_cast %107 : vector<8xf32> to vector<1x8xf32>
    %109 = math.log %108 : vector<1x8xf32>
    %110 = arith.addf %109, %103 : vector<1x8xf32>
    %111 = vector.shape_cast %101 : vector<8x1xf32> to vector<1x8x1xf32>
    %cst_41 = arith.constant dense<0.000000e+00> : vector<1xf32>
    %112 = vector.multi_reduction <add>, %111, %cst_41 [1, 2] : vector<1x8x1xf32> to vector<1xf32>
    %113 = vector.shape_cast %112 : vector<1xf32> to vector<1x1x1xf32>
    %114 = vector.extract %113[0, 0, 0] : f32 from vector<1x1x1xf32>
    %cst_42 = arith.constant 8.000000e+00 : f32
    %115 = arith.divf %114, %cst_42 : f32
    %116 = vector.shape_cast %110 : vector<1x8xf32> to vector<1x1x8xf32>
    %cst_43 = arith.constant dense<0.000000e+00> : vector<1xf32>
    %117 = vector.multi_reduction <add>, %116, %cst_43 [1, 2] : vector<1x1x8xf32> to vector<1xf32>
    %118 = vector.shape_cast %117 : vector<1xf32> to vector<1x1x1xf32>
    %119 = vector.extract %118[0, 0, 0] : f32 from vector<1x1x1xf32>
    %cst_44 = arith.constant 8.000000e+00 : f32
    %120 = arith.divf %119, %cst_44 : f32
    %121 = arith.addf %115, %120 : f32
    %cst_45 = arith.constant 5.000000e-01 : f32
    %122 = arith.mulf %cst_45, %121 : f32
    %123 = vector.shape_cast %92 : vector<8x1xf32> to vector<1x8x1xf32>
    %cst_46 = arith.constant dense<0.000000e+00> : vector<1xf32>
    %124 = vector.multi_reduction <add>, %123, %cst_46 [1, 2] : vector<1x8x1xf32> to vector<1xf32>
    %125 = vector.shape_cast %124 : vector<1xf32> to vector<1x1x1xf32>
    %126 = vector.extract %125[0, 0, 0] : f32 from vector<1x1x1xf32>
    %cst_47 = arith.constant 8.000000e+00 : f32
    %127 = arith.divf %126, %cst_47 : f32
    %128 = arith.subf %122, %127 : f32
    %129 = vector.broadcast %94 : vector<8x1xf32> to vector<8x8xf32>
    %130 = arith.cmpf oge, %85, %129 : vector<8x8xf32>
    %c8_i32 = arith.constant 8 : i32
    %131 = vector.broadcast %c8_i32 : i32 to vector<8x8xi32>
    %132 = arith.select %130, %87, %131 : vector<8x8xi1>, vector<8x8xi32>
    %cst_48 = arith.constant dense<2147483647> : vector<8xi32>
    %133 = vector.multi_reduction <minsi>, %132, %cst_48 [1] : vector<8x8xi32> to vector<8xi32>
    %134 = vector.shape_cast %133 : vector<8xi32> to vector<8x1xi32>
    %135 = tpu.iota {dimensions = array<i32: 0>} : vector<8x1xi32>
    %136 = arith.cmpi eq, %134, %135 : vector<8x1xi32>
    %137 = arith.extui %136 : vector<8x1xi1> to vector<8x1xi32>
    %138 = arith.sitofp %137 : vector<8x1xi32> to vector<8x1xf32>
    %139 = vector.shape_cast %138 : vector<8x1xf32> to vector<1x8x1xf32>
    %cst_49 = arith.constant dense<0.000000e+00> : vector<1xf32>
    %140 = vector.multi_reduction <add>, %139, %cst_49 [1, 2] : vector<1x8x1xf32> to vector<1xf32>
    %141 = vector.shape_cast %140 : vector<1xf32> to vector<1x1x1xf32>
    %142 = vector.extract %141[0, 0, 0] : f32 from vector<1x1x1xf32>
    %cst_50 = arith.constant 8.000000e+00 : f32
    %143 = arith.divf %142, %cst_50 : f32
    %144 = vector.broadcast %103 : vector<1x8xf32> to vector<8x8xf32>
    %145 = arith.cmpf oge, %85, %144 : vector<8x8xf32>
    %c8_i32_51 = arith.constant 8 : i32
    %146 = vector.broadcast %c8_i32_51 : i32 to vector<8x8xi32>
    %147 = arith.select %145, %86, %146 : vector<8x8xi1>, vector<8x8xi32>
    %cst_52 = arith.constant dense<2147483647> : vector<8xi32>
    %148 = vector.multi_reduction <minsi>, %147, %cst_52 [0] : vector<8x8xi32> to vector<8xi32>
    %149 = vector.shape_cast %148 : vector<8xi32> to vector<1x8xi32>
    %150 = tpu.iota {dimensions = array<i32: 1>} : vector<1x8xi32>
    %151 = arith.cmpi eq, %149, %150 : vector<1x8xi32>
    %152 = arith.extui %151 : vector<1x8xi1> to vector<1x8xi32>
    %153 = arith.sitofp %152 : vector<1x8xi32> to vector<1x8xf32>
    %154 = vector.shape_cast %153 : vector<1x8xf32> to vector<1x1x8xf32>
    %cst_53 = arith.constant dense<0.000000e+00> : vector<1xf32>
    %155 = vector.multi_reduction <add>, %154, %cst_53 [1, 2] : vector<1x1x8xf32> to vector<1xf32>
    %156 = vector.shape_cast %155 : vector<1xf32> to vector<1x1x1xf32>
    %157 = vector.extract %156[0, 0, 0] : f32 from vector<1x1x1xf32>
    %cst_54 = arith.constant 8.000000e+00 : f32
    %158 = arith.divf %157, %cst_54 : f32
    %159 = tpu.iota {dimensions = array<i32: 1>} : vector<1x128xi32>
    %c0_i32 = arith.constant 0 : i32
    %160 = vector.broadcast %c0_i32 : i32 to vector<1x128xi32>
    %161 = arith.cmpi eq, %159, %160 : vector<1x128xi32>
    %cst_55 = arith.constant 0.000000e+00 : f32
    %162 = vector.broadcast %128 : f32 to vector<1x128xf32>
    %163 = vector.broadcast %cst_55 : f32 to vector<1x128xf32>
    %164 = arith.select %161, %162, %163 : vector<1x128xi1>, vector<1x128xf32>
    %c1_i32 = arith.constant 1 : i32
    %165 = vector.broadcast %c1_i32 : i32 to vector<1x128xi32>
    %166 = arith.cmpi eq, %159, %165 : vector<1x128xi32>
    %cst_56 = arith.constant 0.000000e+00 : f32
    %167 = vector.broadcast %143 : f32 to vector<1x128xf32>
    %168 = vector.broadcast %cst_56 : f32 to vector<1x128xf32>
    %169 = arith.select %166, %167, %168 : vector<1x128xi1>, vector<1x128xf32>
    %170 = arith.addf %164, %169 : vector<1x128xf32>
    %c2_i32 = arith.constant 2 : i32
    %171 = vector.broadcast %c2_i32 : i32 to vector<1x128xi32>
    %172 = arith.cmpi eq, %159, %171 : vector<1x128xi32>
    %cst_57 = arith.constant 0.000000e+00 : f32
    %173 = vector.broadcast %158 : f32 to vector<1x128xf32>
    %174 = vector.broadcast %cst_57 : f32 to vector<1x128xf32>
    %175 = arith.select %172, %173, %174 : vector<1x128xi1>, vector<1x128xf32>
    %176 = arith.addf %170, %175 : vector<1x128xf32>
    %c0_58 = arith.constant 0 : index
    %c0_59 = arith.constant 0 : index
    %177 = vector.load %arg7[%c0_58, %c0_59] : memref<1x128xf32, #tpu.memory_space<vmem>>, vector<1x128xf32>
    tpu.vector_store %arg7[%c0_58, %c0_59], %176 {strides = array<i32>} : memref<1x128xf32, #tpu.memory_space<vmem>>, vector<1x128xf32>,
    return
  }
}

</mosaic_0001>

<llo_original>
// kernel: contrastive_forward.1
$region0: #{contrastive_forward.1}
  #allocation0 [shape = 'u32[]', space=smem, size = 0x4, offset = 0x4, fixed_abs, tag = 'smem constant byte address 0x4 - core index']
  #allocation1 [shape = 'u32[144,128]{1,0:T(1,128)}', space=vmem, size = 0x12000, scoped, tag = 'internal scratch']
  #allocation2 [shape = 'f32[1,1]{1,0:T(1,128)S(6)}', space=smem, size = 0x200, scoped, tag = 'scoped memory for contrastive_forward.1']
  %s0 = inlined_call_operand.vmem [shape: bf16[8,128], index: 0, kind: input, shape index: {}]
  %s1 = inlined_call_operand.vmem [shape: f32[8,128], index: 1, kind: input, shape index: {}]
  %s2 = inlined_call_operand.vmem [shape: bf16[128,128], index: 2, kind: input, shape index: {}]
  %s3 = inlined_call_operand.vmem [shape: f32[4,128], index: 3, kind: input, shape index: {}]
  %s4 = inlined_call_operand.hbm [shape: bf16[128,128], index: 4, kind: input, shape index: {}]
  %s5 = inlined_call_operand.hbm [shape: bf16[128,128], index: 5, kind: input, shape index: {}]
  %s6 = inlined_call_operand.<no memory space> [shape: f32[1,1], index: 6, kind: input, shape index: {}]
  %s7 = inlined_call_operand.vmem [shape: f32[1,128], index: 7, kind: output, shape index: {}]
  %s8 = sld [smem:[#allocation0]]
  $region46: #{contrastive_forward.1} parent=0
    _
  %s10 = ssub.s32 1, %s8
  %s11 = scalar_select 0, %s10, %s8
  %12 = sst [smem:[#allocation2]] %s6
  $region1: #{contrastive_forward.1} parent=0
    #allocation3 [shape = 'u8[32768]{0}', space=vmem, size = 0x8000, scoped, tag = 'input window, operand 4, single buffered']
    #allocation4 [shape = 's32[1]{0}', space=sflag, size = 0x4, scoped, tag = 'scoped memory for contrastive_forward.1']
    #allocation5 [shape = 'u8[32768]{0}', space=vmem, size = 0x8000, scoped, tag = 'input window, operand 5, single buffered']
    #allocation6 [shape = 's32[1]{0}', space=sflag, size = 0x4, scoped, tag = 'scoped memory for contrastive_forward.1']
    %13 = vsyncpa [#allocation4], 0
    %14 = vsyncpa [#allocation6], 0
    // Predicated region
    $region2: #{contrastive_forward.1} parent=1 // pred_check
      _
    $region3: #{contrastive_forward.1} parent=1 // pred_check_branch
      %16 = sbr.rel (0) target = $region5
    $region4: #{contrastive_forward.1} parent=1 // pred_region
      _
    $region5: #{contrastive_forward.1} parent=1 // pred_fallthru
      _
    // Predicated region
    $region6: #{contrastive_forward.1} parent=1 // pred_check
      _
    $region7: #{contrastive_forward.1} parent=1 // pred_check_branch
      %18 = sbr.rel (0) target = $region9
    $region8: #{contrastive_forward.1} parent=1 // pred_region
      _
    $region9: #{contrastive_forward.1} parent=1 // pred_fallthru
      _
    // Predicated region
    $region10: #{contrastive_forward.1} parent=1 // pred_check
      _
    $region11: #{contrastive_forward.1} parent=1 // pred_check_branch
      %20 = sbr.rel (0) target = $region13
    $region12: #{contrastive_forward.1} parent=1 // pred_region
      _
    $region13: #{contrastive_forward.1} parent=1 // pred_fallthru
      _
    // Predicated region
    $region14: #{contrastive_forward.1} parent=1 // pred_check
      _
    $region15: #{contrastive_forward.1} parent=1 // pred_check_branch
      %22 = sbr.rel (0) target = $region17
    $region16: #{contrastive_forward.1} parent=1 // pred_region
      _
    $region17: #{contrastive_forward.1} parent=1 // pred_fallthru
      _
    // Predicated region
    $region18: #{contrastive_forward.1} parent=1 // pred_check
      _
    $region19: #{contrastive_forward.1} parent=1 // pred_check_branch
      %24 = sbr.rel (0) target = $region21
    $region20: #{contrastive_forward.1} parent=1 // pred_region
      %s26 = ssub.s32 1024, 1024
      %27 = vsyncadd [#allocation4], %s26
      %s28 = sshll.u32 [#allocation3], 4
      %s29 = int_to_ptr.vmem [resolvable:$true] %s28
      %34 = dma.hbm_to_vmem [thread:$0]  %s4, 1024, %s29, [#allocation4], 64, 64, 4
    $region21: #{contrastive_forward.1} parent=1 // pred_fallthru
      _
    // Predicated region
    $region22: #{contrastive_forward.1} parent=1 // pred_check
      _
    $region23: #{contrastive_forward.1} parent=1 // pred_check_branch
      %36 = sbr.rel (0) target = $region25
    $region24: #{contrastive_forward.1} parent=1 // pred_region
      %s38 = ssub.s32 1024, 1024
      %39 = vsyncadd [#allocation6], %s38
      %s40 = sshll.u32 [#allocation5], 4
      %s41 = int_to_ptr.vmem [resolvable:$true] %s40
      %46 = dma.hbm_to_vmem [thread:$0]  %s5, 1024, %s41, [#allocation6], 64, 64, 4
    $region25: #{contrastive_forward.1} parent=1 // pred_fallthru
      _
    // Predicated region
    $region26: #{contrastive_forward.1} parent=1 // pred_check
      _
    $region27: #{contrastive_forward.1} parent=1 // pred_check_branch
      %48 = sbr.rel (0) target = $region29
    $region28: #{contrastive_forward.1} parent=1 // pred_region
      _
    $region29: #{contrastive_forward.1} parent=1 // pred_fallthru
      _
    // Predicated region
    $region30: #{contrastive_forward.1} parent=1 // pred_check
      _
    $region31: #{contrastive_forward.1} parent=1 // pred_check_branch
      %50 = sbr.rel (0) target = $region33
    $region32: #{contrastive_forward.1} parent=1 // pred_region
      %51 = dma.done [#allocation4], 1024
    $region33: #{contrastive_forward.1} parent=1 // pred_fallthru
      _
    // Predicated region
    $region34: #{contrastive_forward.1} parent=1 // pred_check
      _
    $region35: #{contrastive_forward.1} parent=1 // pred_check_branch
      %53 = sbr.rel (0) target = $region37
    $region36: #{contrastive_forward.1} parent=1 // pred_region
      %54 = dma.done [#allocation6], 1024
    $region37: #{contrastive_forward.1} parent=1 // pred_fallthru
      _
    %v56 = vld [vmem:[%s0] sm:$0xf]
    %v57 = vld [vmem:[%s2] sm:$0xf]
    %v58 = vld [vmem:[%s2 + $0x4] sm:$0xf]
    %v59 = vld [vmem:[%s2 + $0x8] sm:$0xf]
    %v60 = vld [vmem:[%s2 + $0xc] sm:$0xf]
    %v61 = vld [vmem:[%s2 + $0x10] sm:$0xf]
    %v62 = vld [vmem:[%s2 + $0x14] sm:$0xf]
    %v63 = vld [vmem:[%s2 + $0x18] sm:$0xf]
    %v64 = vld [vmem:[%s2 + $0x1c] sm:$0xf]
    %v65 = vld [vmem:[%s2 + $0x20] sm:$0xf]
    %v66 = vld [vmem:[%s2 + $0x24] sm:$0xf]
    %v67 = vld [vmem:[%s2 + $0x28] sm:$0xf]
    %v68 = vld [vmem:[%s2 + $0x2c] sm:$0xf]
    %v69 = vld [vmem:[%s2 + $0x30] sm:$0xf]
    %v70 = vld [vmem:[%s2 + $0x34] sm:$0xf]
    %v71 = vld [vmem:[%s2 + $0x38] sm:$0xf]
    %v72 = vld [vmem:[%s2 + $0x3c] sm:$0xf]
    %v89 = vunpack.c.l.b16 %v57
    %v90 = vunpack.c.l.b16 %v58
    %v91 = vunpack.c.l.b16 %v59
    %v92 = vunpack.c.l.b16 %v60
    %v93 = vunpack.c.l.b16 %v61
    %v94 = vunpack.c.l.b16 %v62
    %v95 = vunpack.c.l.b16 %v63
    %v96 = vunpack.c.l.b16 %v64
    %v97 = vunpack.c.l.b16 %v65
    %v98 = vunpack.c.l.b16 %v66
    %v99 = vunpack.c.l.b16 %v67
    %v100 = vunpack.c.l.b16 %v68
    %v101 = vunpack.c.l.b16 %v69
    %v102 = vunpack.c.l.b16 %v70
    %v103 = vunpack.c.l.b16 %v71
    %v104 = vunpack.c.l.b16 %v72
    %v105 = vpack.c.b16 %v90, %v89
    %v106 = vpack.c.b16 %v92, %v91
    %v107 = vpack.c.b16 %v94, %v93
    %v108 = vpack.c.b16 %v96, %v95
    %v109 = vpack.c.b16 %v98, %v97
    %v110 = vpack.c.b16 %v100, %v99
    %v111 = vpack.c.b16 %v102, %v101
    %v112 = vpack.c.b16 %v104, %v103
    %121 = vmatprep.subr.bf16.mxu0 0
    %122 = vmatpush1.bf16.msra.mxu0 %v105
    %123 = vmatprep.subr.bf16.mxu0 0
    %124 = vmatpush1.bf16.msra.mxu0 %v106
    %125 = vmatprep.subr.bf16.mxu0 0
    %126 = vmatpush1.bf16.msra.mxu0 %v107
    %127 = vmatprep.subr.bf16.mxu0 0
    %128 = vmatpush1.bf16.msra.mxu0 %v108
    %129 = vmatprep.subr.bf16.mxu0 0
    %130 = vmatpush1.bf16.msra.mxu0 %v109
    %131 = vmatprep.subr.bf16.mxu0 0
    %132 = vmatpush1.bf16.msra.mxu0 %v110
    %133 = vmatprep.subr.bf16.mxu0 0
    %134 = vmatpush1.bf16.msra.mxu0 %v111
    %135 = vmatprep.subr.bf16.mxu0 0
    %136 = vmatpush1.bf16.msra.mxu0 %v112
    %137 = vmatprep.subr.bf16.mxu0 0
    %138 = vmatpush1.bf16.msra.mxu0 0
    %139 = vmatprep.subr.bf16.mxu0 0
    %140 = vmatpush1.bf16.msra.mxu0 0
    %141 = vmatprep.subr.bf16.mxu0 0
    %142 = vmatpush1.bf16.msra.mxu0 0
    %143 = vmatprep.subr.bf16.mxu0 0
    %144 = vmatpush1.bf16.msra.mxu0 0
    %145 = vmatprep.subr.bf16.mxu0 0
    %146 = vmatpush1.bf16.msra.mxu0 0
    %147 = vmatprep.subr.bf16.mxu0 0
    %148 = vmatpush1.bf16.msra.mxu0 0
    %149 = vmatprep.subr.bf16.mxu0 0
    %150 = vmatpush1.bf16.msra.mxu0 0
    %151 = vmatprep.subr.bf16.mxu0 0
    %152 = vmatpush1.bf16.msra.mxu0 0
    %153 = vmatprep.mubr.bf16.mxu0 0
    %154 = vmatmul.mubr.bf16.gmra.mrb[0].mxu0 %v56
    %v155 = vpop.f32.mrb[0].mxu0
    %v156 = vadd.f32 0.0, %v155
    %v157 = vpop.f32.mrb[0].mxu0
    %v158 = vpop.f32.mrb[0].mxu0
    %v159 = vpop.f32.mrb[0].mxu0
    %160 = vdwg.mxu0
    %v161 = vld [vmem:[%s3] sm:$0x1]
    %v162 = vld [vmem:[%s3 + $0x1] sm:$0x1]
    %v163 = vld [vmem:[#allocation3] sm:$0xf]
    %v164 = vld [vmem:[#allocation3 + $0x4] sm:$0xf]
    %v165 = vld [vmem:[#allocation3 + $0x8] sm:$0xf]
    %v166 = vld [vmem:[#allocation3 + $0xc] sm:$0xf]
    %v167 = vld [vmem:[#allocation3 + $0x10] sm:$0xf]
    %v168 = vld [vmem:[#allocation3 + $0x14] sm:$0xf]
    %v169 = vld [vmem:[#allocation3 + $0x18] sm:$0xf]
    %v170 = vld [vmem:[#allocation3 + $0x1c] sm:$0xf]
    %v171 = vld [vmem:[#allocation3 + $0x20] sm:$0xf]
    %v172 = vld [vmem:[#allocation3 + $0x24] sm:$0xf]
    %v173 = vld [vmem:[#allocation3 + $0x28] sm:$0xf]
    %v174 = vld [vmem:[#allocation3 + $0x2c] sm:$0xf]
    %v175 = vld [vmem:[#allocation3 + $0x30] sm:$0xf]
    %v176 = vld [vmem:[#allocation3 + $0x34] sm:$0xf]
    %v177 = vld [vmem:[#allocation3 + $0x38] sm:$0xf]
    %v178 = vld [vmem:[#allocation3 + $0x3c] sm:$0xf]
    %v179 = vlaneseq
    %v180 = vand.u32 %v179, 127
    %vm181 = vcmp.lt.s32.totalorder %v180, 32
    %182 = vadd.xlane.f32.xlu0 %v156
    %v183 = vpop.xlane.xlu0 %182
    %v184 = vmul.f32 %v183, 0.03125
    %v185 = vsub.f32 %v156, %v184
    %v186 = vsel %vm181, %v185, 0.0
    %v187 = vmul.f32 %v186, %v186
    %188 = vadd.xlane.f32.xlu0 %v187
    %v189 = vpop.xlane.xlu0 %188
    %v190 = vmul.f32 %v189, 0.03125
    %v191 = vadd.f32 %v190, 1e-05
    %v192 = vrsqrt.pop %v191
    %v193 = vmul.f32 %v186, %v192
    %v194 = vlaneseq
    %v195 = vshrl.u32 %v194, 7
    %v196 = vsub.s32 0, %v195
    %v197 = vrot.slane %v161, %v196
    %v198 = vmul.f32 %v193, %v197
    %v199 = vlaneseq
    %v200 = vshrl.u32 %v199, 7
    %v201 = vsub.s32 0, %v200
    %v202 = vrot.slane %v162, %v201
    %v203 = vadd.f32 %v198, %v202
    %v204 = vpack.c.bf16 %v203, %v203
    %v221 = vunpack.c.l.b16 %v163
    %v222 = vunpack.c.l.b16 %v164
    %v223 = vunpack.c.l.b16 %v165
    %v224 = vunpack.c.l.b16 %v166
    %v225 = vunpack.c.l.b16 %v167
    %v226 = vunpack.c.l.b16 %v168
    %v227 = vunpack.c.l.b16 %v169
    %v228 = vunpack.c.l.b16 %v170
    %v229 = vunpack.c.l.b16 %v171
    %v230 = vunpack.c.l.b16 %v172
    %v231 = vunpack.c.l.b16 %v173
    %v232 = vunpack.c.l.b16 %v174
    %v233 = vunpack.c.l.b16 %v175
    %v234 = vunpack.c.l.b16 %v176
    %v235 = vunpack.c.l.b16 %v177
    %v236 = vunpack.c.l.b16 %v178
    %v237 = vpack.c.b16 %v222, %v221
    %v238 = vpack.c.b16 %v224, %v223
    %v239 = vpack.c.b16 %v226, %v225
    %v240 = vpack.c.b16 %v228, %v227
    %v241 = vpack.c.b16 %v230, %v229
    %v242 = vpack.c.b16 %v232, %v231
    %v243 = vpack.c.b16 %v234, %v233
    %v244 = vpack.c.b16 %v236, %v235
    %253 = vmatprep.subr.bf16.mxu0 0
    %254 = vmatpush1.bf16.msra.mxu0 %v237
    %255 = vmatprep.subr.bf16.mxu0 0
    %256 = vmatpush1.bf16.msra.mxu0 %v238
    %257 = vmatprep.subr.bf16.mxu0 0
    %258 = vmatpush1.bf16.msra.mxu0 %v239
    %259 = vmatprep.subr.bf16.mxu0 0
    %260 = vmatpush1.bf16.msra.mxu0 %v240
    %261 = vmatprep.subr.bf16.mxu0 0
    %262 = vmatpush1.bf16.msra.mxu0 %v241
    %263 = vmatprep.subr.bf16.mxu0 0
    %264 = vmatpush1.bf16.msra.mxu0 %v242
    %265 = vmatprep.subr.bf16.mxu0 0
    %266 = vmatpush1.bf16.msra.mxu0 %v243
    %267 = vmatprep.subr.bf16.mxu0 0
    %268 = vmatpush1.bf16.msra.mxu0 %v244
    %269 = vmatprep.subr.bf16.mxu0 0
    %270 = vmatpush1.bf16.msra.mxu0 0
    %271 = vmatprep.subr.bf16.mxu0 0
    %272 = vmatpush1.bf16.msra.mxu0 0
    %273 = vmatprep.subr.bf16.mxu0 0
    %274 = vmatpush1.bf16.msra.mxu0 0
    %275 = vmatprep.subr.bf16.mxu0 0
    %276 = vmatpush1.bf16.msra.mxu0 0
    %277 = vmatprep.subr.bf16.mxu0 0
    %278 = vmatpush1.bf16.msra.mxu0 0
    %279 = vmatprep.subr.bf16.mxu0 0
    %280 = vmatpush1.bf16.msra.mxu0 0
    %281 = vmatprep.subr.bf16.mxu0 0
    %282 = vmatpush1.bf16.msra.mxu0 0
    %283 = vmatprep.subr.bf16.mxu0 0
    %284 = vmatpush1.bf16.msra.mxu0 0
    %285 = vmatprep.mubr.bf16.mxu0 0
    %286 = vmatmul.mubr.bf16.gmra.mrb[0].mxu0 %v204
    %v287 = vpop.f32.mrb[0].mxu0
    %v288 = vadd.f32 0.0, %v287
    %v289 = vpop.f32.mrb[0].mxu0
    %v290 = vpop.f32.mrb[0].mxu0
    %v291 = vpop.f32.mrb[0].mxu0
    %292 = vdwg.mxu0
    %v293 = vld [vmem:[%s1] sm:$0xff]
    %v294 = vld [vmem:[%s3 + $0x2] sm:$0x1]
    %v295 = vld [vmem:[%s3 + $0x3] sm:$0x1]
    %v296 = vld [vmem:[#allocation5] sm:$0xf]
    %v297 = vld [vmem:[#allocation5 + $0x4] sm:$0xf]
    %v298 = vld [vmem:[#allocation5 + $0x8] sm:$0xf]
    %v299 = vld [vmem:[#allocation5 + $0xc] sm:$0xf]
    %v300 = vld [vmem:[#allocation5 + $0x10] sm:$0xf]
    %v301 = vld [vmem:[#allocation5 + $0x14] sm:$0xf]
    %v302 = vld [vmem:[#allocation5 + $0x18] sm:$0xf]
    %v303 = vld [vmem:[#allocation5 + $0x1c] sm:$0xf]
    %v304 = vld [vmem:[#allocation5 + $0x20] sm:$0xf]
    %v305 = vld [vmem:[#allocation5 + $0x24] sm:$0xf]
    %v306 = vld [vmem:[#allocation5 + $0x28] sm:$0xf]
    %v307 = vld [vmem:[#allocation5 + $0x2c] sm:$0xf]
    %v308 = vld [vmem:[#allocation5 + $0x30] sm:$0xf]
    %v309 = vld [vmem:[#allocation5 + $0x34] sm:$0xf]
    %v310 = vld [vmem:[#allocation5 + $0x38] sm:$0xf]
    %v311 = vld [vmem:[#allocation5 + $0x3c] sm:$0xf]
    %vm312 = vcmp.lt.s32.totalorder %v180, 16
    %313 = vadd.xlane.f32.xlu0 %v293
    %v314 = vpop.xlane.xlu0 %313
    %v315 = vmul.f32 %v314, 0.0625
    %v316 = vsub.f32 %v293, %v315
    %v317 = vsel %vm312, %v316, 0.0
    %v318 = vmul.f32 %v317, %v317
    %319 = vadd.xlane.f32.xlu0 %v318
    %v320 = vpop.xlane.xlu0 %319
    %v321 = vmul.f32 %v320, 0.0625
    %v322 = vadd.f32 %v321, 1e-05
    %v323 = vrsqrt.pop %v322
    %v324 = vmul.f32 %v317, %v323
    %v325 = vlaneseq
    %v326 = vshrl.u32 %v325, 7
    %v327 = vsub.s32 0, %v326
    %v328 = vrot.slane %v294, %v327
    %v329 = vmul.f32 %v324, %v328
    %v330 = vlaneseq
    %v331 = vshrl.u32 %v330, 7
    %v332 = vsub.s32 0, %v331
    %v333 = vrot.slane %v295, %v332
    %v334 = vadd.f32 %v329, %v333
    %v335 = vpack.c.bf16 %v334, %v334
    %v352 = vunpack.c.l.b16 %v296
    %v353 = vunpack.c.l.b16 %v297
    %v354 = vunpack.c.l.b16 %v298
    %v355 = vunpack.c.l.b16 %v299
    %v356 = vunpack.c.l.b16 %v300
    %v357 = vunpack.c.l.b16 %v301
    %v358 = vunpack.c.l.b16 %v302
    %v359 = vunpack.c.l.b16 %v303
    %v360 = vunpack.c.l.b16 %v304
    %v361 = vunpack.c.l.b16 %v305
    %v362 = vunpack.c.l.b16 %v306
    %v363 = vunpack.c.l.b16 %v307
    %v364 = vunpack.c.l.b16 %v308
    %v365 = vunpack.c.l.b16 %v309
    %v366 = vunpack.c.l.b16 %v310
    %v367 = vunpack.c.l.b16 %v311
    %v368 = vpack.c.b16 %v353, %v352
    %v369 = vpack.c.b16 %v355, %v354
    %v370 = vpack.c.b16 %v357, %v356
    %v371 = vpack.c.b16 %v359, %v358
    %v372 = vpack.c.b16 %v361, %v360
    %v373 = vpack.c.b16 %v363, %v362
    %v374 = vpack.c.b16 %v365, %v364
    %v375 = vpack.c.b16 %v367, %v366
    %384 = vmatprep.subr.bf16.mxu0 0
    %385 = vmatpush1.bf16.msra.mxu0 %v368
    %386 = vmatprep.subr.bf16.mxu0 0
    %387 = vmatpush1.bf16.msra.mxu0 %v369
    %388 = vmatprep.subr.bf16.mxu0 0
    %389 = vmatpush1.bf16.msra.mxu0 %v370
    %390 = vmatprep.subr.bf16.mxu0 0
    %391 = vmatpush1.bf16.msra.mxu0 %v371
    %392 = vmatprep.subr.bf16.mxu0 0
    %393 = vmatpush1.bf16.msra.mxu0 %v372
    %394 = vmatprep.subr.bf16.mxu0 0
    %395 = vmatpush1.bf16.msra.mxu0 %v373
    %396 = vmatprep.subr.bf16.mxu0 0
    %397 = vmatpush1.bf16.msra.mxu0 %v374
    %398 = vmatprep.subr.bf16.mxu0 0
    %399 = vmatpush1.bf16.msra.mxu0 %v375
    %400 = vmatprep.subr.bf16.mxu0 0
    %401 = vmatpush1.bf16.msra.mxu0 0
    %402 = vmatprep.subr.bf16.mxu0 0
    %403 = vmatpush1.bf16.msra.mxu0 0
    %404 = vmatprep.subr.bf16.mxu0 0
    %405 = vmatpush1.bf16.msra.mxu0 0
    %406 = vmatprep.subr.bf16.mxu0 0
    %407 = vmatpush1.bf16.msra.mxu0 0
    %408 = vmatprep.subr.bf16.mxu0 0
    %409 = vmatpush1.bf16.msra.mxu0 0
    %410 = vmatprep.subr.bf16.mxu0 0
    %411 = vmatpush1.bf16.msra.mxu0 0
    %412 = vmatprep.subr.bf16.mxu0 0
    %413 = vmatpush1.bf16.msra.mxu0 0
    %414 = vmatprep.subr.bf16.mxu0 0
    %415 = vmatpush1.bf16.msra.mxu0 0
    %416 = vmatprep.mubr.bf16.mxu0 0
    %417 = vmatmul.mubr.bf16.gmra.mrb[0].mxu0 %v335
    %v418 = vpop.f32.mrb[0].mxu0
    %v419 = vadd.f32 0.0, %v418
    %v420 = vpop.f32.mrb[0].mxu0
    %v421 = vpop.f32.mrb[0].mxu0
    %v422 = vpop.f32.mrb[0].mxu0
    %423 = vdwg.mxu0
    %v424 = vmul.f32 %v288, %v288
    %425 = vadd.xlane.f32.xlu0 %v424
    %v426 = vpop.xlane.xlu0 %425
    %v427 = vmax.f32 %v426, 1e-24
    %v428 = vrsqrt.pop %v427
    %v429 = vmul.f32 %v419, %v419
    %430 = vadd.xlane.f32.xlu0 %v429
    %v431 = vpop.xlane.xlu0 %430
    %v432 = vmax.f32 %v431, 1e-24
    %v433 = vrsqrt.pop %v432
    %v434 = vmul.f32 %v288, %v428
    %v435 = vmul.f32 %v419, %v433
    %s436 = sld [smem:[#allocation2]]
    %v437 = vpack.c.bf16 %v434, %v434
    %v438 = vpack.c.bf16 %v435, %v435
    %439 = vmatprep.subr.bf16.mxu0 0
    %440 = vmatpush1.bf16.xpose.msra.mxu0 %v438
    %441 = vmatprep.subr.bf16.mxu0 0
    %442 = vmatpush1.bf16.xpose.msra.mxu0 0
    %443 = vmatprep.subr.bf16.mxu0 0
    %444 = vmatpush1.bf16.xpose.msra.mxu0 0
    %445 = vmatprep.subr.bf16.mxu0 0
    %446 = vmatpush1.bf16.xpose.msra.mxu0 0
    %447 = vmatprep.subr.bf16.mxu0 0
    %448 = vmatpush1.bf16.xpose.msra.mxu0 0
    %449 = vmatprep.subr.bf16.mxu0 0
    %450 = vmatpush1.bf16.xpose.msra.mxu0 0
    %451 = vmatprep.subr.bf16.mxu0 0
    %452 = vmatpush1.bf16.xpose.msra.mxu0 0
    %453 = vmatprep.subr.bf16.mxu0 0
    %454 = vmatpush1.bf16.xpose.msra.mxu0 0
    %455 = vmatprep.subr.bf16.mxu0 0
    %456 = vmatpush1.bf16.xpose.msra.mxu0 0
    %457 = vmatprep.subr.bf16.mxu0 0
    %458 = vmatpush1.bf16.xpose.msra.mxu0 0
    %459 = vmatprep.subr.bf16.mxu0 0
    %460 = vmatpush1.bf16.xpose.msra.mxu0 0
    %461 = vmatprep.subr.bf16.mxu0 0
    %462 = vmatpush1.bf16.xpose.msra.mxu0 0
    %463 = vmatprep.subr.bf16.mxu0 0
    %464 = vmatpush1.bf16.xpose.msra.mxu0 0
    %465 = vmatprep.subr.bf16.mxu0 0
    %466 = vmatpush1.bf16.xpose.msra.mxu0 0
    %467 = vmatprep.subr.bf16.mxu0 0
    %468 = vmatpush1.bf16.xpose.msra.mxu0 0
    %469 = vmatprep.subr.bf16.mxu0 0
    %470 = vmatpush1.bf16.xpose.msra.mxu0 0
    %471 = vmatprep.mubr.bf16.mxu0 0
    %472 = vmatmul.mubr.bf16.gmra.mrb[0].mxu0 %v437
    %v473 = vpop.f32.mrb[0].mxu0
    %v474 = vadd.f32 0.0, %v473
    %v475 = vpop.f32.mrb[0].mxu0
    %v476 = vpop.f32.mrb[0].mxu0
    %v477 = vpop.f32.mrb[0].mxu0
    %478 = vdwg.mxu0
    %v479 = vstv %s436
    %v480 = vmul.f32 %v474, %v479
    %v481 = vlaneseq
    %v482 = vshrl.u32 %v481, 7
    %vm483 = vcmp.eq.s32.totalorder %v482, %v180
    %v484 = vsel %vm483, %v480, 0.0
    %vm485 = vcmask 64512
    %v486 = vsel %vm485, %v484, 0.0
    %487 = vadd.xlane.f32.xlu0 %v486
    %v488 = vpop.xlane.xlu0 %487
    %v489 = vsel %vm485, %v480, -inf
    %490 = vmax.xlane.f32.xlu0 %v489
    %v491 = vpop.xlane.xlu0 %490
    %v492 = vsub.f32 %v480, %v491
    %v493 = vmul.f32 %v492, 1.442695
    %v494 = vpow.pop %v493
    %v495 = vsel %vm485, %v494, 0.0
    %496 = vadd.xlane.f32.xlu0 %v495
    %v497 = vpop.xlane.xlu0 %496
    %v498 = vlog2.pop %v497
    %v499 = vmul.f32 %v498, 0.6931472
    %v500 = vadd.f32 %v499, %v491
    %v501 = vrot.slane %v489, 4
    %v502 = vmax.f32 %v489, %v501
    %v503 = vrot.slane %v502, 2
    %v504 = vmax.f32 %v502, %v503
    %v505 = vrot.slane %v504, 1
    %v506 = vmax.f32 %v504, %v505
    %v507 = vsub.f32 %v480, %v506
    %v508 = vmul.f32 %v507, 1.442695
    %v509 = vpow.pop %v508
    %v510 = vsel %vm485, %v509, 0.0
    %v511 = vrot.slane %v510, 4
    %v512 = vadd.f32 %v510, %v511
    %v513 = vrot.slane %v512, 2
    %v514 = vadd.f32 %v512, %v513
    %v515 = vrot.slane %v514, 1
    %v516 = vadd.f32 %v514, %v515
    %v517 = vlog2.pop %v516
    %v518 = vmul.f32 %v517, 0.6931472
    %v519 = vadd.f32 %v518, %v506
    %vm520 = vcmask 7168
    %v521 = vsel %vm520, %v500, 0.0
    %522 = vadd.xlane.f32.xlu0 %v521
    %v523 = vpop.xlane.xlu0 %522
    %v524 = vrot.slane %v523, 4
    %v525 = vadd.f32 %v523, %v524
    %v526 = vrot.slane %v525, 2
    %v527 = vadd.f32 %v525, %v526
    %v528 = vrot.slane %v527, 1
    %v529 = vadd.f32 %v527, %v528
    %s530 = vtos %v529
    %v531 = vrcp.pop 8.0
    %s532 = vtos %v531
    %s533 = smul.f32 %s530, %s532
    %vm534 = vcmask 57344
    %v535 = vsel %vm534, %v519, 0.0
    %536 = vadd.xlane.f32.xlu0 %v535
    %v537 = vpop.xlane.xlu0 %536
    %v538 = vrot.slane %v537, 4
    %v539 = vadd.f32 %v537, %v538
    %v540 = vrot.slane %v539, 2
    %v541 = vadd.f32 %v539, %v540
    %v542 = vrot.slane %v541, 1
    %v543 = vadd.f32 %v541, %v542
    %s544 = vtos %v543
    %v545 = vrcp.pop 8.0
    %s546 = vtos %v545
    %s547 = smul.f32 %s544, %s546
    %s548 = sadd.f32 %s533, %s547
    %s549 = smul.f32 %s548, 0.5
    %v550 = vsel %vm520, %v488, 0.0
    %551 = vadd.xlane.f32.xlu0 %v550
    %v552 = vpop.xlane.xlu0 %551
    %v553 = vrot.slane %v552, 4
    %v554 = vadd.f32 %v552, %v553
    %v555 = vrot.slane %v554, 2
    %v556 = vadd.f32 %v554, %v555
    %v557 = vrot.slane %v556, 1
    %v558 = vadd.f32 %v556, %v557
    %s559 = vtos %v558
    %v560 = vrcp.pop 8.0
    %s561 = vtos %v560
    %s562 = smul.f32 %s559, %s561
    %s563 = ssub.f32 %s549, %s562
    %vm564 = vcmp.ge.f32.partialorder %v480, %v491
    %v565 = vsel %vm564, %v180, 8
    %v566 = vsel %vm485, %v565, 2147483647
    %v567 = vand.u32 %v566, 65535
    %v568 = vshra.s32 %v566, 16
    %v569 = vcvt.s32.f32 %v567
    %v570 = vcvt.s32.f32 %v568
    %571 = vmin.xlane.f32.xlu0 %v570
    %v572 = vpop.xlane.xlu0 %571
    %vm573 = vcmp.eq.f32.partialorder %v570, %v572
    %v574 = vsel %vm573, %v569, inf
    %575 = vmin.xlane.f32.xlu0 %v574
    %v576 = vpop.xlane.xlu0 %575
    %v577 = vcvt.f32.s32 %v576
    %v578 = vcvt.f32.s32 %v572
    %v579 = vshll.u32 %v578, 16
    %v580 = vadd.s32 %v579, %v577
    %vm581 = vcmp.eq.s32.totalorder %v580, %v482
    %v582 = vsel %vm581, 1, 0
    %v583 = vcvt.s32.f32 %v582
    %v584 = vsel %vm520, %v583, 0.0
    %585 = vadd.xlane.f32.xlu0 %v584
    %v586 = vpop.xlane.xlu0 %585
    %v587 = vrot.slane %v586, 4
    %v588 = vadd.f32 %v586, %v587
    %v589 = vrot.slane %v588, 2
    %v590 = vadd.f32 %v588, %v589
    %v591 = vrot.slane %v590, 1
    %v592 = vadd.f32 %v590, %v591
    %s593 = vtos %v592
    %v594 = vrcp.pop 8.0
    %s595 = vtos %v594
    %s596 = smul.f32 %s593, %s595
    %vm597 = vcmp.ge.f32.partialorder %v480, %v506
    %v598 = vsel %vm597, %v482, 8
    %v599 = vsel %vm485, %v598, 2147483647
    %v600 = vrot.slane %v599, 4
    %vm601 = vcmp.lt.s32.totalorder %v599, %v600
    %v602 = vsel %vm601, %v599, %v600
    %v603 = vrot.slane %v602, 2
    %vm604 = vcmp.lt.s32.totalorder %v602, %v603
    %v605 = vsel %vm604, %v602, %v603
    %v606 = vrot.slane %v605, 1
    %vm607 = vcmp.lt.s32.totalorder %v605, %v606
    %v608 = vsel %vm607, %v605, %v606
    %vm609 = vcmp.eq.s32.totalorder %v608, %v180
    %v610 = vsel %vm609, 1, 0
    %v611 = vcvt.s32.f32 %v610
    %v612 = vsel %vm534, %v611, 0.0
    %613 = vadd.xlane.f32.xlu0 %v612
    %v614 = vpop.xlane.xlu0 %613
    %v615 = vrot.slane %v614, 4
    %v616 = vadd.f32 %v614, %v615
    %v617 = vrot.slane %v616, 2
    %v618 = vadd.f32 %v616, %v617
    %v619 = vrot.slane %v618, 1
    %v620 = vadd.f32 %v618, %v619
    %s621 = vtos %v620
    %v622 = vrcp.pop 8.0
    %s623 = vtos %v622
    %s624 = smul.f32 %s621, %s623
    %vm625 = vcmp.eq.s32.totalorder %v180, 0
    %v626 = vstv %s563
    %v627 = vsel %vm625, %v626, 0.0
    %vm628 = vcmp.eq.s32.totalorder %v180, 1
    %v629 = vstv %s596
    %v630 = vsel %vm628, %v629, 0.0
    %v631 = vadd.f32 %v627, %v630
    %vm632 = vcmp.eq.s32.totalorder %v180, 2
    %v633 = vstv %s624
    %v634 = vsel %vm632, %v633, 0.0
    %v635 = vadd.f32 %v631, %v634
    %636 = vst [vmem:[%s7] sm:$0x1] %v635
    // Predicated region
    $region38: #{contrastive_forward.1} parent=1 // pred_check
      _
    $region39: #{contrastive_forward.1} parent=1 // pred_check_branch
      %638 = sbr.rel (0) target = $region41
    $region40: #{contrastive_forward.1} parent=1 // pred_region
      _
    $region41: #{contrastive_forward.1} parent=1 // pred_fallthru
      _
    // Predicated region
    $region42: #{contrastive_forward.1} parent=1 // pred_check
      _
    $region43: #{contrastive_forward.1} parent=1 // pred_check_branch
      %640 = sbr.rel (0) target = $region45
    $region44: #{contrastive_forward.1} parent=1 // pred_region
      _
    $region45: #{contrastive_forward.1} parent=1 // pred_fallthru
      _
    %641 = vsyncpa [#allocation4], 1
    %642 = vsyncpa [#allocation6], 1

</llo_original>
